<compile_context>
chip_gen: v5e
topology: v5e:2x2
jax: 0.10.0
libtpu: 0.0.40
codegen_flags: <defaults>
</compile_context>

<pallas_src>
import functools

import jax
import jax.numpy as jnp
from jax.experimental import pallas as pl
from jax.experimental.pallas import tpu as pltpu


def _group_bn_kernel(x_ref, gamma_ref, beta_ref, m_ref, o_ref, *, eps, inv_l, inv_lm1):
    """One grid step = n_tile batch elements x c_tile channels (whole groups).

    x_ref:     (n_tile, c_tile, HWp)  activations, lane dim padded to %128
    gamma_ref: (1, 1, c_tile)         compact per-channel scale
    beta_ref:  (1, 1, c_tile)         compact per-channel shift
    m_ref:     (c_tile, c_tile)       group-membership matrix (same group -> 1)
    o_ref:     (n_tile, c_tile, HWp)
    """
    x = x_ref[...].astype(jnp.float32)

    # One pass over x: per-channel sum / sum-of-squares (single lane reduce each).
    ch_sum = jnp.sum(x, axis=-1)         # (n_tile, c_tile)
    ch_sumsq = jnp.sum(x * x, axis=-1)   # (n_tile, c_tile)

    # Sum across the cpg channels of each group AND broadcast back to
    # per-channel granularity in one tiny MXU matmul.
    m = m_ref[...]
    grp_sum = jnp.dot(ch_sum, m, preferred_element_type=jnp.float32)
    grp_sumsq = jnp.dot(ch_sumsq, m, preferred_element_type=jnp.float32)

    mean = grp_sum * inv_l                               # (n_tile, c_tile)
    # torch.std default is the UNBIASED (ddof=1) std: (sumsq - L*mean^2)/(L-1).
    var = (grp_sumsq - mean * grp_sum) * inv_lm1
    std = jnp.sqrt(jnp.maximum(var, 0.0))
    inv_std = pl.reciprocal(std + eps, approx=False)     # tiny per-group tensor

    a = gamma_ref[0] * inv_std                           # folded affine scale
    b = beta_ref[0] - mean * a                           # folded affine shift
    o_ref[...] = (x * a[:, :, None] + b[:, :, None]).astype(o_ref.dtype)


def _round_up(v, m):
    return -(-v // m) * m


def _vmem_capacity_bytes():
    try:
        info = pltpu.get_tpu_info()
        cap = int(getattr(info, "vmem_capacity_bytes", 0))
        if cap > 0:
            return cap
    except Exception:
        pass
    return 64 * 1024 * 1024  # conservative default (v7x per-TensorCore VMEM)


def _pick_tiles(N, C, cpg, HWp, itemsize, target_bytes, min_steps=4):
    """Pick (n_tile, c_tile): group-aligned, sublane-legal (c_tile % 8 == 0 or
    c_tile == C), sized from the actual padded bytes, with >= min_steps grid
    steps whenever the problem allows it (megacore + pipelining)."""
    c_opts = [ct for ct in range(cpg, C + 1, cpg)
              if C % ct == 0 and (ct % 8 == 0 or ct == C)]
    n_opts = [d for d in range(1, N + 1) if N % d == 0]
    cands = [(nt, ct, nt * ct * HWp * itemsize, (N // nt) * (C // ct))
             for ct in c_opts for nt in n_opts]
    fits = [c for c in cands if c[2] <= target_bytes]
    if not fits:
        # TODO(synk): a single group-aligned channel tile exceeds the VMEM
        # target; huge feature maps would need a chunked-L two-pass reduction
        # (extra "arbitrary" grid axis + scratch accumulators). Not needed at
        # DETR scales.
        return 1, c_opts[0]
    want = min(min_steps, max(c[3] for c in fits))
    good = [c for c in fits if c[3] >= want]
    nt, ct, _, _ = max(good, key=lambda c: (c[2], c[1]))
    return nt, ct


def group_batchnorm2d(x, gamma, beta, *, group_num: int = 16, eps: float = 1e-10):
    """Pallas implementation of GroupBatchnorm2d.forward.

    x:     (N, C, H, W)
    gamma: (C, 1, 1)
    beta:  (C, 1, 1)
    """
    N, C, H, W = x.shape
    G = group_num
    assert C >= G and C % G == 0
    cpg = C // G
    HW = H * W
    L = cpg * HW                      # true elements per group (stats divisor)
    itemsize = jnp.dtype(x.dtype).itemsize

    # Lane-dense layout: (N, C, HW) with HW padded up to a multiple of 128.
    HWp = _round_up(HW, 128)
    x_r = x.reshape(N, C, HW)
    if HWp != HW:
        x_r = jnp.pad(x_r, ((0, 0), (0, 0), (0, HWp - HW)))

    vmem_cap = _vmem_capacity_bytes()
    target_bytes = max(512 * 1024, min(4 * 1024 * 1024, vmem_cap // 16))
    n_tile, c_tile = _pick_tiles(N, C, cpg, HWp, itemsize, target_bytes)
    block_bytes = n_tile * c_tile * HWp * itemsize

    # Compact per-channel params, tiled to match the channel blocks.
    gamma_r = gamma.reshape(C).astype(jnp.float32).reshape(C // c_tile, 1, c_tile)
    beta_r = beta.reshape(C).astype(jnp.float32).reshape(C // c_tile, 1, c_tile)

    # Group-membership matrix for one channel tile (identical for every block
    # because tiles are group-aligned): m[j, i] = 1 iff channels j, i share a group.
    gid = jnp.arange(c_tile, dtype=jnp.int32) // cpg
    m = (gid[:, None] == gid[None, :]).astype(jnp.float32)

    # VMEM budget: in + out, double-buffered, plus params; clamp to the chip.
    vmem_limit = None
    needed = 4 * block_bytes + 2 * (1024 * 1024)
    if needed > 12 * 1024 * 1024:
        vmem_limit = int(min(needed, 0.6 * vmem_cap))

    kernel = functools.partial(
        _group_bn_kernel, eps=eps,
        inv_l=1.0 / L, inv_lm1=(1.0 / (L - 1)) if L > 1 else float("nan"))

    cost = pl.CostEstimate(
        flops=6 * N * C * HWp,               # pure-bandwidth kernel, ~no MXU work
        transcendentals=2 * N * C,           # sqrt + reciprocal on tiny stats
        bytes_accessed=2 * N * C * HWp * itemsize + 2 * C * 4,
    )

    out = pl.pallas_call(
        kernel,
        out_shape=jax.ShapeDtypeStruct((N, C, HWp), x.dtype),
        grid=(N // n_tile, C // c_tile),
        in_specs=[
            pl.BlockSpec((n_tile, c_tile, HWp), lambda n, c: (n, c, 0)),
            pl.BlockSpec((1, 1, c_tile), lambda n, c: (c, 0, 0)),
            pl.BlockSpec((1, 1, c_tile), lambda n, c: (c, 0, 0)),
            pl.BlockSpec((c_tile, c_tile), lambda n, c: (0, 0)),
        ],
        out_specs=pl.BlockSpec((n_tile, c_tile, HWp), lambda n, c: (n, c, 0)),
        compiler_params=pltpu.CompilerParams(
            dimension_semantics=("parallel", "parallel"),
            vmem_limit_bytes=vmem_limit,
        ),
        cost_estimate=cost,
    )(x_r, gamma_r, beta_r, m)

    if HWp != HW:
        out = out[:, :, :HW]
    return out.reshape(N, C, H, W)


def group_batchnorm2d_ref(x, gamma, beta, *, group_num: int = 16, eps: float = 1e-10):
    """Pure-JAX reference mirroring the PyTorch forward exactly."""
    N, C, H, W = x.shape
    xg = x.reshape(N, group_num, -1)
    mean = jnp.mean(xg, axis=2, keepdims=True)
    var = jnp.sum((xg - mean) ** 2, axis=2, keepdims=True) / (xg.shape[2] - 1)
    std = jnp.sqrt(var)
    xn = ((xg - mean) / (std + eps)).reshape(N, C, H, W)
    return xn * gamma + beta


if __name__ == "__main__":
    key = jax.random.PRNGKey(0)
    k_x, k_gamma, k_x2 = jax.random.split(key, 3)

    N, C = 2, 32
    GROUP_NUM = 16
    EPS = 1e-10

    # Deterministic parameter init (matches __init__ shapes: randn / zeros).
    gamma = jax.random.normal(k_gamma, (C, 1, 1), dtype=jnp.float32)
    beta = jnp.zeros((C, 1, 1), dtype=jnp.float32)

    # Case 1: lane-dense spatial size (H*W = 256, multiple of 128).
    H, W = 16, 16
    x = jax.random.normal(k_x, (N, C, H, W), dtype=jnp.float32)
    out = jax.block_until_ready(
        group_batchnorm2d(x, gamma, beta, group_num=GROUP_NUM, eps=EPS))
    ref = group_batchnorm2d_ref(x, gamma, beta, group_num=GROUP_NUM, eps=EPS)
    assert out.shape == (N, C, H, W)
    assert jnp.allclose(out, ref, rtol=1e-4, atol=1e-4)

    # Case 2: H*W = 30 (not a multiple of 128) -> exercises the lane-padding path.
    H2, W2 = 5, 6
    x2 = jax.random.normal(k_x2, (N, C, H2, W2), dtype=jnp.float32)
    out2 = jax.block_until_ready(
        group_batchnorm2d(x2, gamma, beta, group_num=GROUP_NUM, eps=EPS))
    ref2 = group_batchnorm2d_ref(x2, gamma, beta, group_num=GROUP_NUM, eps=EPS)
    assert out2.shape == (N, C, H2, W2)
    assert jnp.allclose(out2, ref2, rtol=1e-4, atol=1e-4)

    print("KERNEL_OK")
</pallas_src>

<mosaic_0001>
module attributes {stable_mosaic.version = 11 : i64} {
  func.func @_group_bn_kernel(%arg0: i32, %arg1: i32, %arg2: memref<1x16x256xf32, #tpu.memory_space<vmem>>, %arg3: memref<1x1x16xf32, #tpu.memory_space<vmem>>, %arg4: memref<1x1x16xf32, #tpu.memory_space<vmem>>, %arg5: memref<16x16xf32, #tpu.memory_space<vmem>>, %arg6: memref<1x16x256xf32, #tpu.memory_space<vmem>>) attributes {dimension_semantics = [#tpu.dimension_semantics<parallel>, #tpu.dimension_semantics<parallel>], iteration_bounds = array<i64: 2, 2>, scalar_prefetch = 0 : i64, scratch_operands = 0 : i64, tpu.core_type = #tpu.core_type<tc>, window_params = [{transform_indices = @transform_0, window_bounds = array<i64: 1, 16, 256>}, {transform_indices = @transform_1, window_bounds = array<i64: 1, 1, 16>}, {transform_indices = @transform_2, window_bounds = array<i64: 1, 1, 16>}, {pipeline_mode = #tpu.pipeline_mode<synchronous>, transform_indices = @transform_3, window_bounds = array<i64: 16, 16>}, {transform_indices = @transform_4, window_bounds = array<i64: 1, 16, 256>}]} {
    %c0 = arith.constant 0 : index
    %c0_0 = arith.constant 0 : index
    %c0_1 = arith.constant 0 : index
    %0 = vector.load %arg2[%c0, %c0_0, %c0_1] : memref<1x16x256xf32, #tpu.memory_space<vmem>>, vector<1x16x256xf32>
    %cst = arith.constant dense<0.000000e+00> : vector<1x16xf32>
    %1 = vector.multi_reduction <add>, %0, %cst [2] : vector<1x16x256xf32> to vector<1x16xf32>
    %2 = arith.mulf %0, %0 : vector<1x16x256xf32>
    %cst_2 = arith.constant dense<0.000000e+00> : vector<1x16xf32>
    %3 = vector.multi_reduction <add>, %2, %cst_2 [2] : vector<1x16x256xf32> to vector<1x16xf32>
    %c0_3 = arith.constant 0 : index
    %c0_4 = arith.constant 0 : index
    %4 = vector.load %arg5[%c0_3, %c0_4] : memref<16x16xf32, #tpu.memory_space<vmem>>, vector<16x16xf32>
    %cst_5 = arith.constant dense<0.000000e+00> : vector<1x16xf32>
    %5 = tpu.matmul %1, %4, %cst_5 {dimension_numbers = #tpu.dot_dimension_numbers<[1], [0], [0], [1], [0, 0, 1, 1], [], []>} : vector<1x16xf32>, vector<16x16xf32>, vector<1x16xf32> -> vector<1x16xf32>
    %cst_6 = arith.constant dense<0.000000e+00> : vector<1x16xf32>
    %6 = tpu.matmul %3, %4, %cst_6 {dimension_numbers = #tpu.dot_dimension_numbers<[1], [0], [0], [1], [0, 0, 1, 1], [], []>} : vector<1x16xf32>, vector<16x16xf32>, vector<1x16xf32> -> vector<1x16xf32>
    %cst_7 = arith.constant 0.001953125 : f32
    %7 = vector.broadcast %cst_7 : f32 to vector<1x16xf32>
    %8 = arith.mulf %5, %7 : vector<1x16xf32>
    %9 = arith.mulf %8, %5 : vector<1x16xf32>
    %10 = arith.subf %6, %9 : vector<1x16xf32>
    %cst_8 = arith.constant 0.00195694715 : f32
    %11 = vector.broadcast %cst_8 : f32 to vector<1x16xf32>
    %12 = arith.mulf %10, %11 : vector<1x16xf32>
    %cst_9 = arith.constant 0.000000e+00 : f32
    %13 = vector.broadcast %cst_9 : f32 to vector<1x16xf32>
    %14 = arith.maximumf %12, %13 : vector<1x16xf32>
    %15 = math.sqrt %14 : vector<1x16xf32>
    %cst_10 = arith.constant 1.000000e-10 : f32
    %16 = vector.broadcast %cst_10 : f32 to vector<1x16xf32>
    %17 = arith.addf %15, %16 : vector<1x16xf32>
    %18 = tpu.reciprocal %17 : vector<1x16xf32> -> vector<1x16xf32>
    %c0_11 = arith.constant 0 : index
    %c0_12 = arith.constant 0 : index
    %c0_13 = arith.constant 0 : index
    %19 = vector.load %arg3[%c0_11, %c0_12, %c0_13] : memref<1x1x16xf32, #tpu.memory_space<vmem>>, vector<1x1x16xf32>
    %20 = vector.shape_cast %19 : vector<1x1x16xf32> to vector<1x16xf32>
    %21 = arith.mulf %20, %18 : vector<1x16xf32>
    %c0_14 = arith.constant 0 : index
    %c0_15 = arith.constant 0 : index
    %c0_16 = arith.constant 0 : index
    %22 = vector.load %arg4[%c0_14, %c0_15, %c0_16] : memref<1x1x16xf32, #tpu.memory_space<vmem>>, vector<1x1x16xf32>
    %23 = vector.shape_cast %22 : vector<1x1x16xf32> to vector<1x16xf32>
    %24 = arith.mulf %8, %21 : vector<1x16xf32>
    %25 = arith.subf %23, %24 : vector<1x16xf32>
    %26 = vector.shape_cast %21 : vector<1x16xf32> to vector<1x16x1xf32>
    %27 = vector.broadcast %26 : vector<1x16x1xf32> to vector<1x16x256xf32>
    %28 = arith.mulf %0, %27 : vector<1x16x256xf32>
    %29 = vector.shape_cast %25 : vector<1x16xf32> to vector<1x16x1xf32>
    %30 = vector.broadcast %29 : vector<1x16x1xf32> to vector<1x16x256xf32>
    %31 = arith.addf %28, %30 : vector<1x16x256xf32>
    %c0_17 = arith.constant 0 : index
    %c0_18 = arith.constant 0 : index
    %c0_19 = arith.constant 0 : index
    %32 = vector.load %arg6[%c0_17, %c0_18, %c0_19] : memref<1x16x256xf32, #tpu.memory_space<vmem>>, vector<1x16x256xf32>
    tpu.vector_store %arg6[%c0_17, %c0_18, %c0_19], %31 {strides = array<i32>} : memref<1x16x256xf32, #tpu.memory_space<vmem>>, vector<1x16x256xf32>,
    return
  }
  func.func @transform_0(%arg0: i32, %arg1: i32) -> (i32, i32, i32) {
    %c0_i32 = arith.constant 0 : i32
    %c0_i32_0 = arith.constant 0 : i32
    return %arg0, %arg1, %c0_i32 : i32, i32, i32
  }
  func.func @transform_1(%arg0: i32, %arg1: i32) -> (i32, i32, i32) {
    %c0_i32 = arith.constant 0 : i32
    %c0_i32_0 = arith.constant 0 : i32
    %c0_i32_1 = arith.constant 0 : i32
    return %arg1, %c0_i32, %c0_i32_0 : i32, i32, i32
  }
  func.func @transform_2(%arg0: i32, %arg1: i32) -> (i32, i32, i32) {
    %c0_i32 = arith.constant 0 : i32
    %c0_i32_0 = arith.constant 0 : i32
    %c0_i32_1 = arith.constant 0 : i32
    return %arg1, %c0_i32, %c0_i32_0 : i32, i32, i32
  }
  func.func @transform_3(%arg0: i32, %arg1: i32) -> (i32, i32) {
    %c0_i32 = arith.constant 0 : i32
    %c0_i32_0 = arith.constant 0 : i32
    %c0_i32_1 = arith.constant 0 : i32
    return %c0_i32, %c0_i32_0 : i32, i32
  }
  func.func @transform_4(%arg0: i32, %arg1: i32) -> (i32, i32, i32) {
    %c0_i32 = arith.constant 0 : i32
    %c0_i32_0 = arith.constant 0 : i32
    return %arg0, %arg1, %c0_i32 : i32, i32, i32
  }
}

</mosaic_0001>

<llo_original>
// kernel: tpu_custom_call.1
$region0: #{tpu_custom_call.1}
  #allocation0 [shape = 'u32[]', space=smem, size = 0x4, offset = 0x4, fixed_abs, tag = 'smem constant byte address 0x4 - core index']
  #allocation1 [shape = 'u32[72,128]{1,0:T(1,128)}', space=vmem, size = 0x9000, scoped, tag = 'internal scratch']
  %s0 = inlined_call_operand.hbm [shape: f32[2,32,256], index: 0, kind: input, shape index: {}]
  %s1 = inlined_call_operand.hbm [shape: f32[2,1,16], index: 1, kind: input, shape index: {}]
  %s2 = inlined_call_operand.hbm [shape: f32[2,1,16], index: 2, kind: input, shape index: {}]
  %s3 = inlined_call_operand.hbm [shape: f32[16,16], index: 3, kind: input, shape index: {}]
  %s4 = inlined_call_operand.hbm [shape: f32[2,32,256], index: 4, kind: output, shape index: {}]
  %s5 = sld [smem:[#allocation0]]
  $region65: #{tpu_custom_call.1} parent=0
    _
  %s7 = ssub.s32 1, %s5
  %s8 = scalar_select 0, %s7, %s5
  $region1: #{tpu_custom_call.1} parent=0
    #allocation2 [shape = 'u8[32768]{0}', space=vmem, size = 0x8000, scoped, tag = 'input window, operand 0']
    #allocation3 [shape = 's32[2]{0}', space=sflag, size = 0x8, scoped, tag = 'scoped memory for tpu_custom_call.1']
    #allocation4 [shape = 's32[2]{0}', space=sflag, size = 0x8, scoped, tag = 'scoped memory for tpu_custom_call.1']
    #allocation5 [shape = 'u8[1024]{0}', space=vmem, size = 0x400, scoped, tag = 'input window, operand 1']
    #allocation6 [shape = 's32[2]{0}', space=sflag, size = 0x8, scoped, tag = 'scoped memory for tpu_custom_call.1']
    #allocation7 [shape = 'u8[1024]{0}', space=vmem, size = 0x400, scoped, tag = 'input window, operand 2']
    #allocation8 [shape = 'u8[8192]{0}', space=vmem, size = 0x2000, scoped, tag = 'input window, operand 3, single buffered']
    #allocation9 [shape = 's32[1]{0}', space=sflag, size = 0x4, scoped, tag = 'scoped memory for tpu_custom_call.1']
    #allocation10 [shape = 'u8[32768]{0}', space=vmem, size = 0x8000, scoped, tag = 'output window, operand 0']
    %9 = vsyncpa [#allocation3], 0
    %s10 = scalar_lea.sflag [#allocation3], 1
    %11 = vsyncpa %s10, 0
    %12 = vsyncpa [#allocation6], 0
    %s13 = scalar_lea.sflag [#allocation6], 1
    %14 = vsyncpa %s13, 0
    %15 = vsyncpa [#allocation9], 0
    %16 = vsyncpa [#allocation4], 0
    %s17 = scalar_lea.sflag [#allocation4], 1
    %18 = vsyncpa %s17, 0
    loop: start=0, step=1, limit=6
    $region2: #{tpu_custom_call.1} parent=1 // loop_pre_header
      _
    $region3: #{tpu_custom_call.1} parent=1 // loop_header
      %s20 = sphi 0, %s24
      %p21 = scmp.ge.s32.totalorder %s20, 6
      %s27 = sphi 0, %s39
      %s28 = sphi 0, %s35
      %s29 = sphi 0, %s27
      %s30 = sphi 0, %s28
      %s31 = sphi 0, %s29
      %s32 = sphi 0, %s30
      %s44 = sphi 0, %s46
      %s47 = sphi 0, %s44
      %s48 = sphi 0, %s47
      %s64 = sphi 0, %s48
      %s70 = sphi 0, %s72
      %s73 = sphi 0, %s70
      %s74 = sphi 0, %s73
      %s90 = sphi 0, %s74
      %s96 = sphi 0, %s98
      %s99 = sphi 0, %s96
      %s100 = sphi 0, %s99
      %s116 = sphi 0, %s100
      %s120 = sphi 0, %s120
      %s122 = sphi 0, %s120
      %s123 = sphi 0, %s122
      %s137 = sphi 0, %s123
      %s145 = sphi 0, %s147
      %s148 = sphi 0, %s145
      %s149 = sphi 0, %s148
      %s165 = sphi 0, %s149
    $region4: #{tpu_custom_call.1} parent=1 // loop_header_branch
      %23 = sbr.rel (%p21) target = $region8
    $region5: #{tpu_custom_call.1} parent=1 // loop_body
      %s25 = ssub.s32 %s20, 1
      %s26 = ssub.s32 %s20, 2
      %s33 = sadd.s32 1, %s28
      %p34 = scmp.ge.s32.totalorder %s33, 2
      %s35 = scalar_select %p34, 0, %s33
      %s36 = sadd.s32 1, %s27
      %s37 = scalar_select %p34, %s36, %s27
      %p38 = scmp.ge.s32.totalorder %s37, 2
      %s39 = scalar_select %p38, 0, %s37
      %s40 = ssub.s32 %s27, %s39
      %s41 = ssub.s32 %s28, %s35
      %s42 = sor.u32 %s40, %s41
      %p43 = scmp.eq.s32.totalorder %s42, 0
      %s45 = sadd.s32 %s44, 1
      %s46 = scalar_select %p43, %s44, %s45
      %p49 = pneg %p43
      %p50 = scmp.eq.s32.totalorder %s20, 3
      %p51 = por %p49, %p50
      %p52 = scmp.ne.s32.totalorder %s44, %s47
      %p53 = scmp.eq.s32.totalorder %s20, 0
      %p54 = por %p52, %p53
      %p55 = scmp.ne.s32.totalorder %s44, %s47
      %p56 = scmp.eq.s32.totalorder %s25, 3
      %p57 = por %p55, %p56
      %p58 = scmp.ne.s32.totalorder %s47, %s48
      %p59 = scmp.eq.s32.totalorder %s25, 0
      %p60 = por %p58, %p59
      %p61 = scmp.ne.s32.totalorder %s47, %s48
      %p62 = scmp.eq.s32.totalorder %s26, 3
      %p63 = por %p61, %p62
      %p65 = scmp.ne.s32.totalorder %s48, %s64
      %p66 = scmp.eq.s32.totalorder %s26, 0
      %p67 = por %p65, %p66
      %s68 = ssub.s32 %s28, %s35
      %p69 = scmp.eq.s32.totalorder %s68, 0
      %s71 = sadd.s32 %s70, 1
      %s72 = scalar_select %p69, %s70, %s71
      %p75 = pneg %p69
      %p76 = scmp.eq.s32.totalorder %s20, 3
      %p77 = por %p75, %p76
      %p78 = scmp.ne.s32.totalorder %s70, %s73
      %p79 = scmp.eq.s32.totalorder %s20, 0
      %p80 = por %p78, %p79
      %p81 = scmp.ne.s32.totalorder %s70, %s73
      %p82 = scmp.eq.s32.totalorder %s25, 3
      %p83 = por %p81, %p82
      %p84 = scmp.ne.s32.totalorder %s73, %s74
      %p85 = scmp.eq.s32.totalorder %s25, 0
      %p86 = por %p84, %p85
      %p87 = scmp.ne.s32.totalorder %s73, %s74
      %p88 = scmp.eq.s32.totalorder %s26, 3
      %p89 = por %p87, %p88
      %p91 = scmp.ne.s32.totalorder %s74, %s90
      %p92 = scmp.eq.s32.totalorder %s26, 0
      %p93 = por %p91, %p92
      %s94 = ssub.s32 %s28, %s35
      %p95 = scmp.eq.s32.totalorder %s94, 0
      %s97 = sadd.s32 %s96, 1
      %s98 = scalar_select %p95, %s96, %s97
      %p101 = pneg %p95
      %p102 = scmp.eq.s32.totalorder %s20, 3
      %p103 = por %p101, %p102
      %p104 = scmp.ne.s32.totalorder %s96, %s99
      %p105 = scmp.eq.s32.totalorder %s20, 0
      %p106 = por %p104, %p105
      %p107 = scmp.ne.s32.totalorder %s96, %s99
      %p108 = scmp.eq.s32.totalorder %s25, 3
      %p109 = por %p107, %p108
      %p110 = scmp.ne.s32.totalorder %s99, %s100
      %p111 = scmp.eq.s32.totalorder %s25, 0
      %p112 = por %p110, %p111
      %p113 = scmp.ne.s32.totalorder %s99, %s100
      %p114 = scmp.eq.s32.totalorder %s26, 3
      %p115 = por %p113, %p114
      %p117 = scmp.ne.s32.totalorder %s100, %s116
      %p118 = scmp.eq.s32.totalorder %s26, 0
      %p119 = por %p117, %p118
      %s121 = sadd.s32 %s120, 1
      %p124 = scmp.eq.s32.totalorder %s20, 3
      %p125 = scmp.ne.s32.totalorder %s120, %s122
      %p126 = scmp.eq.s32.totalorder %s20, 0
      %p127 = por %p125, %p126
      %p128 = scmp.ne.s32.totalorder %s120, %s122
      %p129 = scmp.eq.s32.totalorder %s25, 3
      %p130 = por %p128, %p129
      %p131 = scmp.ne.s32.totalorder %s122, %s123
      %p132 = scmp.eq.s32.totalorder %s25, 0
      %p133 = por %p131, %p132
      %p134 = scmp.ne.s32.totalorder %s122, %s123
      %p135 = scmp.eq.s32.totalorder %s26, 3
      %p136 = por %p134, %p135
      %p138 = scmp.ne.s32.totalorder %s123, %s137
      %p139 = scmp.eq.s32.totalorder %s26, 0
      %p140 = por %p138, %p139
      %s141 = ssub.s32 %s27, %s39
      %s142 = ssub.s32 %s28, %s35
      %s143 = sor.u32 %s141, %s142
      %p144 = scmp.eq.s32.totalorder %s143, 0
      %s146 = sadd.s32 %s145, 1
      %s147 = scalar_select %p144, %s145, %s146
      %p150 = pneg %p144
      %p151 = scmp.eq.s32.totalorder %s20, 3
      %p152 = por %p150, %p151
      %p153 = scmp.ne.s32.totalorder %s145, %s148
      %p154 = scmp.eq.s32.totalorder %s20, 0
      %p155 = por %p153, %p154
      %p156 = scmp.ne.s32.totalorder %s145, %s148
      %p157 = scmp.eq.s32.totalorder %s25, 3
      %p158 = por %p156, %p157
      %p159 = scmp.ne.s32.totalorder %s148, %s149
      %p160 = scmp.eq.s32.totalorder %s25, 0
      %p161 = por %p159, %p160
      %p162 = scmp.ne.s32.totalorder %s148, %s149
      %p163 = scmp.eq.s32.totalorder %s26, 3
      %p164 = por %p162, %p163
      %p166 = scmp.ne.s32.totalorder %s149, %s165
      %p167 = scmp.eq.s32.totalorder %s26, 0
      %p168 = por %p166, %p167
      %p169 = scmp.le.s32.totalorder 1, %s20
      %p170 = scmp.lt.s32.totalorder %s20, 5
      %p171 = pnand %p169, %p170
      %p172 = pneg %p171
      // Predicated region
      $region9: #{tpu_custom_call.1} parent=5 // pred_check
        _
      $region10: #{tpu_custom_call.1} parent=5 // pred_check_branch
        %174 = sbr.rel (%p171) target = $region12
      $region11: #{tpu_custom_call.1} parent=5 // pred_region
        %s175 = ssub.s32 %s20, 1
        // Predicated region
        $region13: #{tpu_custom_call.1} parent=11 // pred_check
          %p176 = pneg %p133
        $region14: #{tpu_custom_call.1} parent=11 // pred_check_branch
          %178 = sbr.rel (%p176) target = $region16
        $region15: #{tpu_custom_call.1} parent=11 // pred_region
          %180 = vsyncadd [#allocation9], 0
          %s181 = sshll.u32 %s3, 4
          %s182 = int_to_ptr.hbm [resolvable:$true] %s181
          %s183 = sshll.u32 [#allocation8], 4
          %s184 = int_to_ptr.vmem [resolvable:$true] %s183
          %189 = dma.hbm_to_vmem [thread:$0]  %s182, 256, %s184, [#allocation9], 128, 128, 8
        $region16: #{tpu_custom_call.1} parent=11 // pred_fallthru
          _
      $region12: #{tpu_custom_call.1} parent=5 // pred_fallthru
        _
      %p190 = scmp.lt.s32.totalorder %s20, 4
      // Predicated region
      $region17: #{tpu_custom_call.1} parent=5 // pred_check
        %p191 = pneg %p190
      $region18: #{tpu_custom_call.1} parent=5 // pred_check_branch
        %193 = sbr.rel (%p191) target = $region20
      $region19: #{tpu_custom_call.1} parent=5 // pred_region
        // Predicated region
        $region21: #{tpu_custom_call.1} parent=19 // pred_check
          %p194 = pneg %p54
        $region22: #{tpu_custom_call.1} parent=19 // pred_check_branch
          %196 = sbr.rel (%p194) target = $region24
        $region23: #{tpu_custom_call.1} parent=19 // pred_region
          %s197 = sand.u32 %s44, 1
          %s198 = scalar_lea.sflag [#allocation3], %s197
          %s199 = sand.u32 %s44, 1
          %s200 = smul.addr %s199, 32
          %s201 = scalar_lea.vmem [#allocation2], %s200
          %s202 = smul.u32 2, %s28
          %204 = vsyncadd %s198, 0
          %s205 = smul.addr %s202, 2
          %s206 = smul.addr %s27, 8
          %s207 = sadd.s32 %s205, %s206
          %s208 = smul.addr %s207, 8
          %s209 = scalar_lea.hbm %s0, %s208
          %s210 = sshll.u32 %s209, 4
          %s211 = int_to_ptr.hbm [resolvable:$true] %s210
          %s212 = sshll.u32 %s201, 4
          %s213 = int_to_ptr.vmem [resolvable:$true] %s212
          %218 = dma.hbm_to_vmem [thread:$0]  %s211, 512, %s213, %s198, 256, 256, 16
        $region24: #{tpu_custom_call.1} parent=19 // pred_fallthru
          _
        // Predicated region
        $region25: #{tpu_custom_call.1} parent=19 // pred_check
          %p219 = pneg %p80
        $region26: #{tpu_custom_call.1} parent=19 // pred_check_branch
          %221 = sbr.rel (%p219) target = $region28
        $region27: #{tpu_custom_call.1} parent=19 // pred_region
          %s222 = sand.u32 %s20, 1
          %s223 = scalar_lea.sflag [#allocation6], %s222
          %s224 = sand.u32 %s70, 1
          %s225 = scalar_lea.vmem [#allocation5], %s224
          %227 = vsyncadd %s223, 0
          %s228 = scalar_lea.hbm %s1, %s28
          %s230 = sshll.u32 %s228, 4
          %s231 = int_to_ptr.hbm [resolvable:$true] %s230
          %s232 = sshll.u32 %s225, 4
          %s233 = int_to_ptr.vmem [resolvable:$true] %s232
          %235 = dma.hbm_to_vmem [thread:$0]  %s231, 16, %s233, %s223
        $region28: #{tpu_custom_call.1} parent=19 // pred_fallthru
          _
        // Predicated region
        $region29: #{tpu_custom_call.1} parent=19 // pred_check
          %p236 = pneg %p106
        $region30: #{tpu_custom_call.1} parent=19 // pred_check_branch
          %238 = sbr.rel (%p236) target = $region32
        $region31: #{tpu_custom_call.1} parent=19 // pred_region
          %s239 = sand.u32 %s20, 1
          %s240 = scalar_lea.sflag [#allocation6], %s239
          %s241 = sand.u32 %s96, 1
          %s242 = scalar_lea.vmem [#allocation7], %s241
          %244 = vsyncadd %s240, 0
          %s245 = scalar_lea.hbm %s2, %s28
          %s247 = sshll.u32 %s245, 4
          %s248 = int_to_ptr.hbm [resolvable:$true] %s247
          %s249 = sshll.u32 %s242, 4
          %s250 = int_to_ptr.vmem [resolvable:$true] %s249
          %252 = dma.hbm_to_vmem [thread:$0]  %s248, 16, %s250, %s240
        $region32: #{tpu_custom_call.1} parent=19 // pred_fallthru
          _
      $region20: #{tpu_custom_call.1} parent=5 // pred_fallthru
        _
      %p253 = scmp.le.s32.totalorder 1, %s20
      %p254 = scmp.lt.s32.totalorder %s20, 5
      %p255 = pnand %p253, %p254
      %p256 = pneg %p255
      // Predicated region
      $region33: #{tpu_custom_call.1} parent=5 // pred_check
        _
      $region34: #{tpu_custom_call.1} parent=5 // pred_check_branch
        %258 = sbr.rel (%p255) target = $region36
      $region35: #{tpu_custom_call.1} parent=5 // pred_region
        %s259 = ssub.s32 %s20, 1
        %s260 = sand.u32 %s47, 1
        %s261 = scalar_lea.sflag [#allocation3], %s260
        %s262 = sand.u32 %s47, 1
        %s263 = smul.addr %s262, 32
        %s264 = scalar_lea.vmem [#allocation2], %s263
        // Predicated region
        $region37: #{tpu_custom_call.1} parent=35 // pred_check
          %p265 = pneg %p60
        $region38: #{tpu_custom_call.1} parent=35 // pred_check_branch
          %267 = sbr.rel (%p265) target = $region40
        $region39: #{tpu_custom_call.1} parent=35 // pred_region
          %269 = dma.done %s261, 512
        $region40: #{tpu_custom_call.1} parent=35 // pred_fallthru
          _
        %s270 = sand.u32 %s25, 1
        %s271 = scalar_lea.sflag [#allocation6], %s270
        %s272 = sand.u32 %s73, 1
        %s273 = scalar_lea.vmem [#allocation5], %s272
        // Predicated region
        $region41: #{tpu_custom_call.1} parent=35 // pred_check
          %p274 = pneg %p86
        $region42: #{tpu_custom_call.1} parent=35 // pred_check_branch
          %276 = sbr.rel (%p274) target = $region44
        $region43: #{tpu_custom_call.1} parent=35 // pred_region
          %278 = dma.done %s271, 16
        $region44: #{tpu_custom_call.1} parent=35 // pred_fallthru
          _
        %s279 = sand.u32 %s25, 1
        %s280 = scalar_lea.sflag [#allocation6], %s279
        %s281 = sand.u32 %s99, 1
        %s282 = scalar_lea.vmem [#allocation7], %s281
        // Predicated region
        $region45: #{tpu_custom_call.1} parent=35 // pred_check
          %p283 = pneg %p112
        $region46: #{tpu_custom_call.1} parent=35 // pred_check_branch
          %285 = sbr.rel (%p283) target = $region48
        $region47: #{tpu_custom_call.1} parent=35 // pred_region
          %287 = dma.done %s280, 16
        $region48: #{tpu_custom_call.1} parent=35 // pred_fallthru
          _
        // Predicated region
        $region49: #{tpu_custom_call.1} parent=35 // pred_check
          %p288 = pneg %p133
        $region50: #{tpu_custom_call.1} parent=35 // pred_check_branch
          %290 = sbr.rel (%p288) target = $region52
        $region51: #{tpu_custom_call.1} parent=35 // pred_region
          %292 = dma.done [#allocation9], 256
        $region52: #{tpu_custom_call.1} parent=35 // pred_fallthru
          _
        %s293 = sand.u32 %s47, 1
        %s294 = scalar_lea.sflag [#allocation3], %s293
        %s295 = sand.u32 %s47, 1
        %s296 = smul.addr %s295, 32
        %s297 = scalar_lea.vmem [#allocation2], %s296
        %p298 = pneg %p60
        %p299 = pneg %p57
        %s300 = sand.u32 %s25, 1
        %s301 = scalar_lea.sflag [#allocation6], %s300
        %s302 = sand.u32 %s73, 1
        %s303 = scalar_lea.vmem [#allocation5], %s302
        %p304 = pneg %p86
        %p305 = pneg %p83
        %s306 = sand.u32 %s25, 1
        %s307 = scalar_lea.sflag [#allocation6], %s306
        %s308 = sand.u32 %s99, 1
        %s309 = scalar_lea.vmem [#allocation7], %s308
        %p310 = pneg %p112
        %p311 = pneg %p109
        %p312 = pneg %p133
        %p313 = pneg %p130
        %p314 = pneg %p161
        %p315 = pneg %p158
        %s316 = sand.u32 %s148, 1
        %s317 = scalar_lea.sflag [#allocation4], %s316
        %s318 = sand.u32 %s148, 1
        %s319 = smul.addr %s318, 32
        %s320 = scalar_lea.vmem [#allocation10], %s319
        %s321 = smul.u32 2, %s30
        %s322 = smul.u32 2, %s30
        %v323 = vld [vmem:[%s264] sm:$0xff]
        %v324 = vld [vmem:[%s264 + $0x8] sm:$0xff]
        %v325 = vld [vmem:[%s264 + $0x10] sm:$0xff]
        %v326 = vld [vmem:[%s264 + $0x18] sm:$0xff]
        %v327 = vadd.f32 %v323, %v324
        %328 = vadd.xlane.f32.xlu0 %v327
        %v329 = vpop.xlane.xlu0 %328
        %v330 = vadd.f32 %v325, %v326
        %331 = vadd.xlane.f32.xlu0 %v330
        %v332 = vpop.xlane.xlu0 %331
        %v333 = vmul.f32 %v323, %v323
        %v334 = vmul.f32 %v324, %v324
        %v335 = vmul.f32 %v325, %v325
        %v336 = vmul.f32 %v326, %v326
        %v337 = vadd.f32 %v333, %v334
        %338 = vadd.xlane.f32.xlu0 %v337
        %v339 = vpop.xlane.xlu0 %338
        %v340 = vadd.f32 %v335, %v336
        %341 = vadd.xlane.f32.xlu0 %v340
        %v342 = vpop.xlane.xlu0 %341
        %v343 = vld [vmem:[#allocation8] sm:$0xff]
        %v344 = vld [vmem:[#allocation8 + $0x8] sm:$0xff]
        %v347 = vlaneseq
        %v348 = vand.u32 %v347, 127
        %v349 = vperm.slane %v329, %v348
        %v350 = vadd.s32 %v348, 4294967288
        %v351 = vperm.slane %v332, %v350
        %vm352 = vcmask 130112
        %v353 = vsel %vm352, %v351, %v349
        %vm354 = vcmask 130048
        %v355 = vsel %vm354, %v353, 0
        %357 = vmatpush.msra.mxu0 0.0
        %358 = vmatpush.msra.mxu0 0.0
        %359 = vmatpush.msra.mxu0 0.0
        %360 = vmatpush.msra.mxu0 0.0
        %361 = vmatpush.msra.mxu0 0.0
        %362 = vmatpush.msra.mxu0 0.0
        %363 = vmatpush.msra.mxu0 0.0
        %364 = vmatpush.msra.mxu0 0.0
        %365 = vmatpush.msra.mxu0 0.0
        %366 = vmatpush.msra.mxu0 0.0
        %367 = vmatpush.msra.mxu0 0.0
        %368 = vmatpush.msra.mxu0 0.0
        %369 = vmatpush.msra.mxu0 0.0
        %370 = vmatpush.msra.mxu0 0.0
        %371 = vmatpush.msra.mxu0 %v344
        %372 = vmatpush.msra.mxu0 %v343
        %373 = vmatmul.f32.gmra.mxu0 %v355
        %v374 = vpop.f32.mrf.mxu0
        %v375 = vadd.f32 0.0, %v374
        %376 = vdwg.mxu0
        %v379 = vperm.slane %v339, %v348
        %v380 = vperm.slane %v342, %v350
        %v381 = vsel %vm352, %v380, %v379
        %v382 = vsel %vm354, %v381, 0
        %384 = vmatpush.msra.mxu0 0.0
        %385 = vmatpush.msra.mxu0 0.0
        %386 = vmatpush.msra.mxu0 0.0
        %387 = vmatpush.msra.mxu0 0.0
        %388 = vmatpush.msra.mxu0 0.0
        %389 = vmatpush.msra.mxu0 0.0
        %390 = vmatpush.msra.mxu0 0.0
        %391 = vmatpush.msra.mxu0 0.0
        %392 = vmatpush.msra.mxu0 0.0
        %393 = vmatpush.msra.mxu0 0.0
        %394 = vmatpush.msra.mxu0 0.0
        %395 = vmatpush.msra.mxu0 0.0
        %396 = vmatpush.msra.mxu0 0.0
        %397 = vmatpush.msra.mxu0 0.0
        %398 = vmatpush.msra.mxu0 %v344
        %399 = vmatpush.msra.mxu0 %v343
        %400 = vmatmul.f32.gmra.mxu0 %v382
        %v401 = vpop.f32.mrf.mxu0
        %v402 = vadd.f32 0.0, %v401
        %403 = vdwg.mxu0
        %v404 = vmul.f32 %v375, 0.001953125
        %v405 = vmul.f32 %v404, %v375
        %v406 = vsub.f32 %v402, %v405
        %v407 = vmul.f32 %v406, 0.0019569471
        %v408 = vmax.f32 %v407, 0.0
        %v409 = vrsqrt.pop %v408
        %v410 = vmul.f32 %v409, %v408
        %v411 = vmul.f32 %v410, %v409
        %v412 = vmul.f32 0.5, %v411
        %v413 = vsub.f32 1.5, %v412
        %v414 = vmul.f32 %v409, %v413
        %v415 = vmul.f32 %v408, %v414
        %vm416 = vcmp.eq.f32.partialorder %v408, inf
        %v417 = vsel %vm416, %v408, %v415
        %vm418 = vcmp.eq.f32.partialorder %v408, 0.0
        %v419 = vand.u32 %v408, 2147483648
        %v420 = vsel %vm418, %v419, %v417
        %v421 = vadd.f32 %v420, 1e-10
        %v422 = vrcp.pop %v421
        %v423 = vmul.f32 %v421, %v422
        %v424 = vsub.f32 1.0, %v423
        %v425 = vmul.f32 %v422, %v424
        %v426 = vadd.f32 %v422, %v425
        %vm427 = vweird.f32 %v421
        %vm428 = vweird.f32 %v422
        %vm429 = vmor %vm427, %vm428
        %v430 = vsel %vm429, %v422, %v426
        %v431 = vand.u32 2147483647, %v421
        %vm432 = vcmp.eq.f32.partialorder %v431, 8.507059e+37
        %v433 = vand.u32 %v421, 2147483648
        %v434 = vor.u32 1.1754944e-38, %v433
        %v435 = vsel %vm432, %v434, %v430
        %v436 = vld [vmem:[%s273] sm:$0x1]
        %v437 = vmul.f32 %v436, %v435
        %v438 = vld [vmem:[%s282] sm:$0x1]
        %v439 = vmul.f32 %v404, %v437
        %v440 = vsub.f32 %v438, %v439
        %v441 = vperm.slane %v437, 0
        %v442 = vlaneseq
        %v443 = vshrl.u32 %v442, 7
        %445 = vset.pattern.permute.xlu0 %v443
        %446 = vperm.xlu0 %445, %v441
        %v447 = vpop.permute.xlu0 %446
        %v448 = vlaneseq
        %v449 = vshrl.u32 %v448, 7
        %v450 = vadd.s32 %v449, 8
        %451 = vset.pattern.permute.xlu0 %v450
        %452 = vperm.xlu0 %451, %v441
        %v453 = vpop.permute.xlu0 %452
        %v454 = vmul.f32 %v323, %v447
        %v455 = vmul.f32 %v324, %v447
        %v456 = vmul.f32 %v325, %v453
        %v457 = vmul.f32 %v326, %v453
        %v458 = vperm.slane %v440, 0
        %v459 = vlaneseq
        %v460 = vshrl.u32 %v459, 7
        %462 = vset.pattern.permute.xlu0 %v460
        %463 = vperm.xlu0 %462, %v458
        %v464 = vpop.permute.xlu0 %463
        %v465 = vlaneseq
        %v466 = vshrl.u32 %v465, 7
        %v467 = vadd.s32 %v466, 8
        %468 = vset.pattern.permute.xlu0 %v467
        %469 = vperm.xlu0 %468, %v458
        %v470 = vpop.permute.xlu0 %469
        %v471 = vadd.f32 %v454, %v464
        %v472 = vadd.f32 %v455, %v464
        %v473 = vadd.f32 %v456, %v470
        %v474 = vadd.f32 %v457, %v470
        %475 = vst [vmem:[%s320] sm:$0xff] %v471
        %476 = vst [vmem:[%s320 + $0x8] sm:$0xff] %v472
        %477 = vst [vmem:[%s320 + $0x10] sm:$0xff] %v473
        %478 = vst [vmem:[%s320 + $0x18] sm:$0xff] %v474
        %s479 = sand.u32 %s148, 1
        %s480 = scalar_lea.sflag [#allocation4], %s479
        %s481 = sand.u32 %s148, 1
        %s482 = smul.addr %s481, 32
        %s483 = scalar_lea.vmem [#allocation10], %s482
        // Predicated region
        $region53: #{tpu_custom_call.1} parent=35 // pred_check
          %p484 = pneg %p158
        $region54: #{tpu_custom_call.1} parent=35 // pred_check_branch
          %486 = sbr.rel (%p484) target = $region56
        $region55: #{tpu_custom_call.1} parent=35 // pred_region
          %s487 = smul.u32 2, %s30
          %489 = vsyncadd %s480, 0
          %s490 = smul.addr %s487, 2
          %s491 = smul.addr %s29, 8
          %s492 = sadd.s32 %s490, %s491
          %s493 = smul.addr %s492, 8
          %s494 = scalar_lea.hbm %s4, %s493
          %s495 = sshll.u32 %s483, 4
          %s496 = int_to_ptr.vmem [resolvable:$true] %s495
          %s497 = sshll.u32 %s494, 4
          %s498 = int_to_ptr.hbm [resolvable:$true] %s497
          %503 = dma.vmem_to_hbm [thread:$0]  %s496, 512, %s498, %s480, 256, 256, 16
        $region56: #{tpu_custom_call.1} parent=35 // pred_fallthru
          _
      $region36: #{tpu_custom_call.1} parent=5 // pred_fallthru
        _
      %p504 = scmp.le.s32.totalorder 2, %s20
      // Predicated region
      $region57: #{tpu_custom_call.1} parent=5 // pred_check
        %p505 = pneg %p504
      $region58: #{tpu_custom_call.1} parent=5 // pred_check_branch
        %507 = sbr.rel (%p505) target = $region60
      $region59: #{tpu_custom_call.1} parent=5 // pred_region
        %s508 = ssub.s32 %s20, 2
        // Predicated region
        $region61: #{tpu_custom_call.1} parent=59 // pred_check
          %p509 = pneg %p164
        $region62: #{tpu_custom_call.1} parent=59 // pred_check_branch
          %511 = sbr.rel (%p509) target = $region64
        $region63: #{tpu_custom_call.1} parent=59 // pred_region
          %s512 = sand.u32 %s149, 1
          %s513 = scalar_lea.sflag [#allocation4], %s512
          %s514 = sand.u32 %s149, 1
          %s515 = smul.addr %s514, 32
          %s516 = scalar_lea.vmem [#allocation10], %s515
          %518 = dma.done %s513, 512
        $region64: #{tpu_custom_call.1} parent=59 // pred_fallthru
          _
      $region60: #{tpu_custom_call.1} parent=5 // pred_fallthru
        _
    $region6: #{tpu_custom_call.1} parent=1 // loop_footer
      %s24 = sadd.s32 1, %s20
    $region7: #{tpu_custom_call.1} parent=1 // loop_footer_branch
      %19 = sbr.rel target = $region3
    $region8: #{tpu_custom_call.1} parent=1 // loop_exit
      _
    %519 = vsyncpa [#allocation3], 1
    %s520 = scalar_lea.sflag [#allocation3], 1
    %521 = vsyncpa %s520, 1
    %522 = vsyncpa [#allocation6], 1
    %s523 = scalar_lea.sflag [#allocation6], 1
    %524 = vsyncpa %s523, 1
    %525 = vsyncpa [#allocation9], 1
    %526 = vsyncpa [#allocation4], 1
    %s527 = scalar_lea.sflag [#allocation4], 1
    %528 = vsyncpa %s527, 1

</llo_original>
